<compile_context>
chip_gen: v7x
topology: tpu7x:2x2x1
jax: 0.10.0
libtpu: 0.0.40
codegen_flags: <defaults>
</compile_context>

<pallas_src>
import numpy as np
import jax
import jax.numpy as jnp
from jax import lax
from jax.experimental import pallas as pl
from jax.experimental.pallas import tpu as pltpu

NUM_HEADS = 32            # implied: every embedding dim is 32 and weight.view(1, num_heads, 1)
MULTI_HOP_MAX_DIST = 5    # module hyperparameter (not set in __init__ of the snippet)


def _attn_bias_kernel(ee_ref,    # (G, D*H, M)  bf16  hop/mask-scaled edge embeddings, channels-first
                      spb_ref,   # (G, H, M)    bf16  spatial-pos bias + virtual-token border
                      ab_ref,    # (G, 1, M)    f32   flattened attn_bias
                      edis_ref,  # (H, D*H)     bf16  transposed vstacked edge_dis_encoder weights
                      out_ref):  # (G, H, M)    f32   channels-first attention bias
    G = ee_ref.shape[0]
    f32 = jnp.float32

    w = edis_ref[...]                        # (H, D*H), loaded once, reused across graphs
    # attn_bias is added twice in the reference (graph_attn_bias init + final add).
    ab2 = 2.0 * ab_ref[...]                  # (G, 1, M) f32

    for g in range(G):                       # static unroll; G is small
        # ONE fused K = D*H bf16 MXU matmul, f32 accumulation, result already (H, M):
        # lane axis = M (lane-dense), no in-kernel transpose, no epilogue slicing.
        edge = jnp.dot(w, ee_ref[g], preferred_element_type=f32)        # (H, M)
        # lane axes of all three terms are M -> pure VPU adds, sublane broadcast for ab2.
        out_ref[g] = edge + spb_ref[g].astype(f32) + ab2[g]


def _pick_graphs_per_step(B, M, H, DH):
    """Graphs per grid step: amortize ~0.35us/step overhead, stay inside (8,128)-padding-aware
    VMEM budget, and keep enough grid steps for pipelining / v7x dual-TC sharding."""
    def rup(x, m):
        return ((x + m - 1) // m) * m

    m_pad = rup(M, 128)                       # lane padding of the flattened N1*N1 axis
    per_graph = (rup(DH, 16) * m_pad * 2      # ee     bf16, (16,128) tiles
                 + rup(H, 16) * m_pad * 2     # spbtok bf16
                 + rup(1, 8) * m_pad * 4      # attn_bias f32, (8,128) tiles
                 + rup(H, 8) * m_pad * 4)     # output f32
    fixed = 2 * rup(H, 16) * rup(DH, 128) * 2  # double-buffered edis weights

    cap = None
    try:
        cap = getattr(pltpu.get_tpu_info(), "vmem_capacity_bytes", None)
    except Exception:
        cap = None
    if not cap:
        cap = 64 * 1024 * 1024                # conservative default: v7x per-TensorCore VMEM
    vmem_limit = min(int(0.5 * cap), 64 * 1024 * 1024)
    budget = int(0.75 * vmem_limit)           # headroom for compiler-internal scratch

    min_steps = min(4, B)                     # never collapse the grid to one step
    g_pick = 1
    for g in range(B, 0, -1):
        if B % g != 0 or B // g < min_steps:
            continue
        if fixed + 2 * g * per_graph <= budget:   # x2: default double-buffered blocks
            g_pick = g
            break
    return g_pick, vmem_limit


def init_params(key):
    k1, k2, k3, k4 = jax.random.split(key, 4)
    H = NUM_HEADS
    edge_enc = 0.02 * jax.random.normal(k1, (1537, H), jnp.float32)
    edge_enc = edge_enc.at[0].set(0.0)            # padding_idx=0
    edge_dis = 0.02 * jax.random.normal(k2, (131072, 1), jnp.float32)
    spe = 0.02 * jax.random.normal(k3, (512, H), jnp.float32)
    spe = spe.at[0].set(0.0)                      # padding_idx=0
    token = 0.02 * jax.random.normal(k4, (1, H), jnp.float32)
    return dict(edge_enc=edge_enc, edge_dis=edge_dis, spe=spe, token=token)


def molecule_attn_bias(params, data, mask_2d):
    attn_bias = data['attn_bias'].astype(jnp.float32)     # (B, N+1, N+1)
    spatial_pos = data['spatial_pos'].astype(jnp.int32)   # (B, N, N)
    edge_input = data['edge_input']                       # (B, N, N, Dmax, F) int
    B, N1, _ = attn_bias.shape
    N = spatial_pos.shape[1]
    H = NUM_HEADS
    D = MULTI_HOP_MAX_DIST
    DH = D * H
    M = N1 * N1

    mask = mask_2d.astype(jnp.float32)                    # (B,)

    # ---------------- glue (fused by XLA around the pallas_call) ----------------
    # TODO(synk): the nn.Embedding gathers (edge_encoder / spatial_pos_encoder) are
    # data-dependent gathers with no clean tiled Pallas equivalent; kept in plain JAX.

    # mask / clamped hop count, padded to N1 x N1 with a zero virtual-token border so the
    # edge contribution is exactly zero on the border rows/cols (folded into ee below).
    spc = jnp.where(spatial_pos == 0, 1, spatial_pos)
    spc = jnp.where(spc > 1, spc - 1, spc)
    spc = jnp.clip(spc, 0, D).astype(jnp.float32)         # clamped hop count, >= 1
    escale = mask[:, None, None] / spc                    # (B, N, N)
    escale_p = jnp.pad(escale, ((0, 0), (1, 0), (1, 0)))  # (B, N1, N1)

    # edge embeddings: gather, mean over F, hop/mask scaling folded in, then a
    # channels-first (D*H major, N1*N1 lane) bf16 layout so the kernel's matmul result is
    # natively transposed.  All steps after the gather are element-wise / layout-only, so
    # XLA emits them as one producer fusion writing the bf16 stream once.
    ei = edge_input[:, :, :, :D, :].astype(jnp.int32)                     # (B, N, N, D, F)
    ei_p = jnp.pad(ei, ((0, 0), (1, 0), (1, 0), (0, 0), (0, 0)))          # border -> padding_idx 0
    ee = params['edge_enc'][ei_p].mean(axis=-2)                           # (B, N1, N1, D, H) f32
    ee = ee * escale_p[..., None, None]
    ee_t = jnp.transpose(ee, (0, 3, 4, 1, 2)).reshape(B, DH, M).astype(jnp.bfloat16)
    # TODO(synk): on v7x, ee_t/edis could be cast to fp8 e4m3 with a per-tensor scale to
    # halve the dominant stream; kept bf16 here pending numerics validation.

    # masked spatial-pos bias + virtual-token border, channels-first, bf16 (tiny values).
    spb = params['spe'][spatial_pos] * mask[:, None, None, None]          # (B, N, N, H)
    spb_t = jnp.transpose(spb, (0, 3, 1, 2))                              # (B, H, N, N)
    spb_t = jnp.pad(spb_t, ((0, 0), (0, 0), (1, 0), (1, 0)))              # (B, H, N1, N1)
    idx = jnp.arange(N1)
    border = ((idx[:, None] == 0) | (idx[None, :] == 0)).astype(jnp.float32)   # (N1, N1)
    tok = params['token'].astype(jnp.float32).reshape(1, H, 1, 1)
    spbtok = (spb_t + tok * border[None, None]).reshape(B, H, M).astype(jnp.bfloat16)

    # attn_bias stays f32 (accuracy) — only 4 B / position and lane-aligned in the kernel.
    ab = attn_bias.reshape(B, 1, M)

    # vstacked + transposed per-distance (H, H) weights -> single K = D*H contraction.
    edis_t = params['edge_dis'].reshape(-1, H, H)[:D].reshape(DH, H).T.astype(jnp.bfloat16)  # (H, DH)

    G, vmem_limit = _pick_graphs_per_step(B, M, H, DH)
    grid = (B // G,)

    flops = 2 * B * H * M * DH
    bytes_accessed = (B * M * (2 * DH + 2 * H + 4)   # ee (bf16) + spbtok (bf16) + attn_bias (f32)
                      + 2 * H * DH                   # edis
                      + 4 * B * H * M)               # output

    grid_spec = pltpu.PrefetchScalarGridSpec(
        num_scalar_prefetch=0,
        grid=grid,
        in_specs=[
            pl.BlockSpec((G, DH, M), lambda b: (b, 0, 0)),
            # TODO(synk): if xprof still shows exposed DMA on the ee stream with small G,
            # add pipeline_mode=pl.Buffered(3) here (needs the VMEM headroom above).
            pl.BlockSpec((G, H, M), lambda b: (b, 0, 0)),
            pl.BlockSpec((G, 1, M), lambda b: (b, 0, 0)),
            pl.BlockSpec((H, DH), lambda b: (0, 0)),
        ],
        out_specs=pl.BlockSpec((G, H, M), lambda b: (b, 0, 0)),
    )
    out = pl.pallas_call(
        _attn_bias_kernel,
        out_shape=jax.ShapeDtypeStruct((B, H, M), jnp.float32),
        grid_spec=grid_spec,
        compiler_params=pltpu.CompilerParams(
            dimension_semantics=("parallel",),
            vmem_limit_bytes=vmem_limit),
        cost_estimate=pl.CostEstimate(
            flops=flops, transcendentals=0, bytes_accessed=bytes_accessed),
    )(ee_t, spbtok, ab, edis_t)

    # contiguous last-dim split: metadata-only, no HBM traffic (unlike the old transpose).
    return out.reshape(B, H, N1, N1)


def molecule_attn_bias_reference(params, data, mask_2d):
    """Pure-JAX transcription of the PyTorch forward (for verification)."""
    attn_bias = data['attn_bias'].astype(jnp.float32)
    spatial_pos = data['spatial_pos'].astype(jnp.int32)
    edge_input = data['edge_input']
    B, N1, _ = attn_bias.shape
    N = spatial_pos.shape[1]
    H = NUM_HEADS
    D = MULTI_HOP_MAX_DIST
    m = mask_2d.astype(jnp.float32)

    gab = jnp.broadcast_to(attn_bias[:, None], (B, H, N1, N1))
    spb = params['spe'][spatial_pos]                               # (B, N, N, H)
    spb = jnp.transpose(spb, (0, 3, 1, 2)) * m[:, None, None, None]
    gab = gab.at[:, :, 1:, 1:].add(spb)
    token = params['token'].reshape(1, H, 1)
    gab = gab.at[:, :, 1:, 0].add(token)
    gab = gab.at[:, :, 0, :].add(token)

    sp_ = jnp.where(spatial_pos == 0, 1, spatial_pos)
    sp_ = jnp.where(sp_ > 1, sp_ - 1, sp_)
    sp_ = jnp.clip(sp_, 0, D)
    ei = edge_input[:, :, :, :D, :]
    ee = params['edge_enc'][ei].mean(-2)                           # (B, N, N, D, H)
    max_dist = ee.shape[-2]
    eif = jnp.transpose(ee, (3, 0, 1, 2, 4)).reshape(max_dist, -1, H)
    edis = params['edge_dis'].reshape(-1, H, H)[:max_dist]
    eif = jnp.einsum('dbh,dhk->dbk', eif, edis, precision=lax.Precision.HIGHEST)
    ee2 = jnp.transpose(eif.reshape(max_dist, B, N, N, H), (1, 2, 3, 0, 4))
    eb = ee2.sum(-2) / sp_.astype(jnp.float32)[..., None]
    eb = jnp.transpose(eb, (0, 3, 1, 2)) * m[:, None, None, None]
    gab = gab.at[:, :, 1:, 1:].add(eb)
    return gab + attn_bias[:, None]


if __name__ == "__main__":
    key = jax.random.PRNGKey(0)
    kp, ka, ks, ke = jax.random.split(key, 4)

    B, N, H = 2, 8, NUM_HEADS
    N1 = N + 1
    RAW_DIST, F = 8, 3

    params = init_params(kp)
    data = {
        'attn_bias': jax.random.normal(ka, (B, N1, N1), jnp.float32),
        'spatial_pos': jax.random.randint(ks, (B, N, N), 0, 30, jnp.int32),
        'x': jnp.zeros((B, N, 1), jnp.int32),                      # only sizes are used
        'edge_input': jax.random.randint(ke, (B, N, N, RAW_DIST, F), 0, 1537, jnp.int32),
        'attn_edge_type': jnp.zeros((B, N, N, F), jnp.int32),      # unpacked but unused in forward
    }
    mask_2d = jnp.array([1.0, 0.0], jnp.float32)

    out = jax.block_until_ready(molecule_attn_bias(params, data, mask_2d))
    assert out.shape == (B, H, N1, N1) and out.dtype == jnp.float32

    ref = jax.block_until_ready(molecule_attn_bias_reference(params, data, mask_2d))
    # bf16 MXU operands + bf16 bias streams (all tiny-magnitude); attn_bias kept in f32.
    np.testing.assert_allclose(np.asarray(out), np.asarray(ref), rtol=1e-3, atol=1e-3)
    print("KERNEL_OK")
</pallas_src>

<mosaic_0001>
module attributes {stable_mosaic.version = 11 : i64} {
  func.func @_attn_bias_kernel(%arg0: i32, %arg1: memref<1x160x81xbf16, #tpu.memory_space<vmem>>, %arg2: memref<1x32x81xbf16, #tpu.memory_space<vmem>>, %arg3: memref<1x1x81xf32, #tpu.memory_space<vmem>>, %arg4: memref<32x160xbf16, #tpu.memory_space<vmem>>, %arg5: memref<1x32x81xf32, #tpu.memory_space<vmem>>) attributes {dimension_semantics = [#tpu.dimension_semantics<parallel>], iteration_bounds = array<i64: 2>, scalar_prefetch = 0 : i64, scratch_operands = 0 : i64, tpu.core_type = #tpu.core_type<tc>, window_params = [{transform_indices = @transform_0, window_bounds = array<i64: 1, 160, 81>}, {transform_indices = @transform_1, window_bounds = array<i64: 1, 32, 81>}, {transform_indices = @transform_2, window_bounds = array<i64: 1, 1, 81>}, {pipeline_mode = #tpu.pipeline_mode<synchronous>, transform_indices = @transform_3, window_bounds = array<i64: 32, 160>}, {transform_indices = @transform_4, window_bounds = array<i64: 1, 32, 81>}]} {
    %c0 = arith.constant 0 : index
    %c0_0 = arith.constant 0 : index
    %0 = vector.load %arg4[%c0, %c0_0] : memref<32x160xbf16, #tpu.memory_space<vmem>>, vector<32x160xbf16>
    %c0_1 = arith.constant 0 : index
    %c0_2 = arith.constant 0 : index
    %c0_3 = arith.constant 0 : index
    %1 = vector.load %arg3[%c0_1, %c0_2, %c0_3] : memref<1x1x81xf32, #tpu.memory_space<vmem>>, vector<1x1x81xf32>
    %cst = arith.constant 2.000000e+00 : f32
    %2 = vector.broadcast %cst : f32 to vector<1x1x81xf32>
    %3 = arith.mulf %2, %1 : vector<1x1x81xf32>
    %c0_4 = arith.constant 0 : index
    %c0_5 = arith.constant 0 : index
    %c0_6 = arith.constant 0 : index
    %4 = vector.load %arg1[%c0_4, %c0_5, %c0_6] : memref<1x160x81xbf16, #tpu.memory_space<vmem>>, vector<1x160x81xbf16>
    %5 = vector.shape_cast %4 : vector<1x160x81xbf16> to vector<160x81xbf16>
    %cst_7 = arith.constant dense<0.000000e+00> : vector<32x81xf32>
    %6 = tpu.matmul %0, %5, %cst_7 {dimension_numbers = #tpu.dot_dimension_numbers<[1], [0], [0], [1], [0, 0, 1, 1], [], []>} : vector<32x160xbf16>, vector<160x81xbf16>, vector<32x81xf32> -> vector<32x81xf32>
    %c0_8 = arith.constant 0 : index
    %c0_9 = arith.constant 0 : index
    %c0_10 = arith.constant 0 : index
    %7 = vector.load %arg2[%c0_8, %c0_9, %c0_10] : memref<1x32x81xbf16, #tpu.memory_space<vmem>>, vector<1x32x81xbf16>
    %8 = vector.shape_cast %7 : vector<1x32x81xbf16> to vector<32x81xbf16>
    %9 = arith.extf %8 : vector<32x81xbf16> to vector<32x81xf32>
    %10 = arith.addf %6, %9 : vector<32x81xf32>
    %11 = vector.shape_cast %3 : vector<1x1x81xf32> to vector<1x81xf32>
    %12 = vector.broadcast %11 : vector<1x81xf32> to vector<32x81xf32>
    %13 = arith.addf %10, %12 : vector<32x81xf32>
    %c0_11 = arith.constant 0 : index
    %c0_12 = arith.constant 0 : index
    %c0_13 = arith.constant 0 : index
    %14 = vector.load %arg5[%c0_11, %c0_12, %c0_13] : memref<1x32x81xf32, #tpu.memory_space<vmem>>, vector<1x32x81xf32>
    %15 = vector.shape_cast %14 : vector<1x32x81xf32> to vector<32x81xf32>
    %16 = vector.shape_cast %13 : vector<32x81xf32> to vector<1x32x81xf32>
    tpu.vector_store %arg5[%c0_11, %c0_12, %c0_13], %16 {strides = array<i32>} : memref<1x32x81xf32, #tpu.memory_space<vmem>>, vector<1x32x81xf32>,
    return
  }
  func.func @transform_0(%arg0: i32) -> (i32, i32, i32) {
    %c0_i32 = arith.constant 0 : i32
    %c0_i32_0 = arith.constant 0 : i32
    %c0_i32_1 = arith.constant 0 : i32
    return %arg0, %c0_i32, %c0_i32_0 : i32, i32, i32
  }
  func.func @transform_1(%arg0: i32) -> (i32, i32, i32) {
    %c0_i32 = arith.constant 0 : i32
    %c0_i32_0 = arith.constant 0 : i32
    %c0_i32_1 = arith.constant 0 : i32
    return %arg0, %c0_i32, %c0_i32_0 : i32, i32, i32
  }
  func.func @transform_2(%arg0: i32) -> (i32, i32, i32) {
    %c0_i32 = arith.constant 0 : i32
    %c0_i32_0 = arith.constant 0 : i32
    %c0_i32_1 = arith.constant 0 : i32
    return %arg0, %c0_i32, %c0_i32_0 : i32, i32, i32
  }
  func.func @transform_3(%arg0: i32) -> (i32, i32) {
    %c0_i32 = arith.constant 0 : i32
    %c0_i32_0 = arith.constant 0 : i32
    %c0_i32_1 = arith.constant 0 : i32
    return %c0_i32, %c0_i32_0 : i32, i32
  }
  func.func @transform_4(%arg0: i32) -> (i32, i32, i32) {
    %c0_i32 = arith.constant 0 : i32
    %c0_i32_0 = arith.constant 0 : i32
    %c0_i32_1 = arith.constant 0 : i32
    return %arg0, %c0_i32, %c0_i32_0 : i32, i32, i32
  }
}

</mosaic_0001>

<llo_original>
// kernel: tpu_custom_call.1
$region0: #{tpu_custom_call.1}
  #allocation0 [shape = 'u32[]', space=smem, size = 0x4, offset = 0x4, fixed_abs, tag = 'smem constant byte address 0x4 - core index']
  #allocation1 [shape = 'u32[144,128]{1,0:T(1,128)}', space=vmem, size = 0x12000, scoped, tag = 'internal scratch']
  %s0 = inlined_call_operand.hbm [shape: bf16[2,160,81], index: 0, kind: input, shape index: {}]
  %s1 = inlined_call_operand.hbm [shape: bf16[2,32,81], index: 1, kind: input, shape index: {}]
  %s2 = inlined_call_operand.vmem [shape: f32[2,1,81], index: 2, kind: input, shape index: {}]
  %s3 = inlined_call_operand.hbm [shape: bf16[32,160], index: 3, kind: input, shape index: {}]
  %s4 = inlined_call_operand.hbm [shape: f32[2,32,81], index: 4, kind: output, shape index: {}]
  %s5 = sld [smem:[#allocation0]]
  $region61: #{tpu_custom_call.1} parent=0
    _
  %s7 = ssub.s32 1, %s5
  %s8 = scalar_select 0, %s7, %s5
  $region1: #{tpu_custom_call.1} parent=0
    #allocation2 [shape = 'u8[81920]{0}', space=vmem, size = 0x14000, scoped, tag = 'input window, operand 0']
    #allocation3 [shape = 's32[2]{0}', space=sflag, size = 0x8, scoped, tag = 'scoped memory for tpu_custom_call.1']
    #allocation4 [shape = 's32[2]{0}', space=sflag, size = 0x8, scoped, tag = 'scoped memory for tpu_custom_call.1']
    #allocation5 [shape = 'u8[16384]{0}', space=vmem, size = 0x4000, scoped, tag = 'input window, operand 1']
    #allocation6 [shape = 's32[2]{0}', space=sflag, size = 0x8, scoped, tag = 'scoped memory for tpu_custom_call.1']
    #allocation7 [shape = 'u8[16384]{0}', space=vmem, size = 0x4000, scoped, tag = 'input window, operand 3, single buffered']
    #allocation8 [shape = 'u8[32768]{0}', space=vmem, size = 0x8000, scoped, tag = 'output window, operand 0']
    %9 = vsyncpa [#allocation3], 0
    %s10 = scalar_lea.sflag [#allocation3], 1
    %11 = vsyncpa %s10, 0
    %12 = vsyncpa [#allocation6], 0
    %s13 = scalar_lea.sflag [#allocation6], 1
    %14 = vsyncpa %s13, 0
    %15 = vsyncpa [#allocation4], 0
    %s16 = scalar_lea.sflag [#allocation4], 1
    %17 = vsyncpa %s16, 0
    loop: start=0, step=1, limit=4
    $region2: #{tpu_custom_call.1} parent=1 // loop_pre_header
      _
    $region3: #{tpu_custom_call.1} parent=1 // loop_header
      %s19 = sphi 0, %s23
      %p20 = scmp.ge.s32.totalorder %s19, 4
      %s29 = sphi 0, %s31
      %s32 = sphi 0, %s29
      %s33 = sphi 0, %s32
      %s49 = sphi 0, %s33
      %s55 = sphi 0, %s57
      %s58 = sphi 0, %s55
      %s59 = sphi 0, %s58
      %s75 = sphi 0, %s59
      %s81 = sphi 0, %s83
      %s84 = sphi 0, %s81
      %s85 = sphi 0, %s84
      %s101 = sphi 0, %s85
      %s105 = sphi 0, %s105
      %s107 = sphi 0, %s105
      %s108 = sphi 0, %s107
      %s122 = sphi 0, %s108
      %s128 = sphi 0, %s130
      %s131 = sphi 0, %s128
      %s132 = sphi 0, %s131
      %s148 = sphi 0, %s132
    $region4: #{tpu_custom_call.1} parent=1 // loop_header_branch
      %22 = sbr.rel (%p20) target = $region8
    $region5: #{tpu_custom_call.1} parent=1 // loop_body
      %s24 = ssub.s32 %s19, 1
      %s25 = ssub.s32 %s19, 2
      %s26 = sadd.s32 %s19, 1
      %s27 = ssub.s32 %s19, %s26
      %p28 = scmp.eq.s32.totalorder %s27, 0
      %s30 = sadd.s32 %s29, 1
      %s31 = scalar_select %p28, %s29, %s30
      %p34 = pneg %p28
      %p35 = scmp.eq.s32.totalorder %s19, 1
      %p36 = por %p34, %p35
      %p37 = scmp.ne.s32.totalorder %s29, %s32
      %p38 = scmp.eq.s32.totalorder %s19, 0
      %p39 = por %p37, %p38
      %p40 = scmp.ne.s32.totalorder %s29, %s32
      %p41 = scmp.eq.s32.totalorder %s24, 1
      %p42 = por %p40, %p41
      %p43 = scmp.ne.s32.totalorder %s32, %s33
      %p44 = scmp.eq.s32.totalorder %s24, 0
      %p45 = por %p43, %p44
      %p46 = scmp.ne.s32.totalorder %s32, %s33
      %p47 = scmp.eq.s32.totalorder %s25, 1
      %p48 = por %p46, %p47
      %p50 = scmp.ne.s32.totalorder %s33, %s49
      %p51 = scmp.eq.s32.totalorder %s25, 0
      %p52 = por %p50, %p51
      %s53 = ssub.s32 %s19, %s26
      %p54 = scmp.eq.s32.totalorder %s53, 0
      %s56 = sadd.s32 %s55, 1
      %s57 = scalar_select %p54, %s55, %s56
      %p60 = pneg %p54
      %p61 = scmp.eq.s32.totalorder %s19, 1
      %p62 = por %p60, %p61
      %p63 = scmp.ne.s32.totalorder %s55, %s58
      %p64 = scmp.eq.s32.totalorder %s19, 0
      %p65 = por %p63, %p64
      %p66 = scmp.ne.s32.totalorder %s55, %s58
      %p67 = scmp.eq.s32.totalorder %s24, 1
      %p68 = por %p66, %p67
      %p69 = scmp.ne.s32.totalorder %s58, %s59
      %p70 = scmp.eq.s32.totalorder %s24, 0
      %p71 = por %p69, %p70
      %p72 = scmp.ne.s32.totalorder %s58, %s59
      %p73 = scmp.eq.s32.totalorder %s25, 1
      %p74 = por %p72, %p73
      %p76 = scmp.ne.s32.totalorder %s59, %s75
      %p77 = scmp.eq.s32.totalorder %s25, 0
      %p78 = por %p76, %p77
      %s79 = ssub.s32 %s19, %s26
      %p80 = scmp.eq.s32.totalorder %s79, 0
      %s82 = sadd.s32 %s81, 1
      %s83 = scalar_select %p80, %s81, %s82
      %p86 = pneg %p80
      %p87 = scmp.eq.s32.totalorder %s19, 1
      %p88 = por %p86, %p87
      %p89 = scmp.ne.s32.totalorder %s81, %s84
      %p90 = scmp.eq.s32.totalorder %s19, 0
      %p91 = por %p89, %p90
      %p92 = scmp.ne.s32.totalorder %s81, %s84
      %p93 = scmp.eq.s32.totalorder %s24, 1
      %p94 = por %p92, %p93
      %p95 = scmp.ne.s32.totalorder %s84, %s85
      %p96 = scmp.eq.s32.totalorder %s24, 0
      %p97 = por %p95, %p96
      %p98 = scmp.ne.s32.totalorder %s84, %s85
      %p99 = scmp.eq.s32.totalorder %s25, 1
      %p100 = por %p98, %p99
      %p102 = scmp.ne.s32.totalorder %s85, %s101
      %p103 = scmp.eq.s32.totalorder %s25, 0
      %p104 = por %p102, %p103
      %s106 = sadd.s32 %s105, 1
      %p109 = scmp.eq.s32.totalorder %s19, 1
      %p110 = scmp.ne.s32.totalorder %s105, %s107
      %p111 = scmp.eq.s32.totalorder %s19, 0
      %p112 = por %p110, %p111
      %p113 = scmp.ne.s32.totalorder %s105, %s107
      %p114 = scmp.eq.s32.totalorder %s24, 1
      %p115 = por %p113, %p114
      %p116 = scmp.ne.s32.totalorder %s107, %s108
      %p117 = scmp.eq.s32.totalorder %s24, 0
      %p118 = por %p116, %p117
      %p119 = scmp.ne.s32.totalorder %s107, %s108
      %p120 = scmp.eq.s32.totalorder %s25, 1
      %p121 = por %p119, %p120
      %p123 = scmp.ne.s32.totalorder %s108, %s122
      %p124 = scmp.eq.s32.totalorder %s25, 0
      %p125 = por %p123, %p124
      %s126 = ssub.s32 %s19, %s26
      %p127 = scmp.eq.s32.totalorder %s126, 0
      %s129 = sadd.s32 %s128, 1
      %s130 = scalar_select %p127, %s128, %s129
      %p133 = pneg %p127
      %p134 = scmp.eq.s32.totalorder %s19, 1
      %p135 = por %p133, %p134
      %p136 = scmp.ne.s32.totalorder %s128, %s131
      %p137 = scmp.eq.s32.totalorder %s19, 0
      %p138 = por %p136, %p137
      %p139 = scmp.ne.s32.totalorder %s128, %s131
      %p140 = scmp.eq.s32.totalorder %s24, 1
      %p141 = por %p139, %p140
      %p142 = scmp.ne.s32.totalorder %s131, %s132
      %p143 = scmp.eq.s32.totalorder %s24, 0
      %p144 = por %p142, %p143
      %p145 = scmp.ne.s32.totalorder %s131, %s132
      %p146 = scmp.eq.s32.totalorder %s25, 1
      %p147 = por %p145, %p146
      %p149 = scmp.ne.s32.totalorder %s132, %s148
      %p150 = scmp.eq.s32.totalorder %s25, 0
      %p151 = por %p149, %p150
      %p152 = scmp.le.s32.totalorder 1, %s19
      %p153 = scmp.lt.s32.totalorder %s19, 3
      %p154 = pnand %p152, %p153
      %p155 = pneg %p154
      // Predicated region
      $region9: #{tpu_custom_call.1} parent=5 // pred_check
        _
      $region10: #{tpu_custom_call.1} parent=5 // pred_check_branch
        %157 = sbr.rel (%p154) target = $region12
      $region11: #{tpu_custom_call.1} parent=5 // pred_region
        %s158 = ssub.s32 %s19, 1
        // Predicated region
        $region13: #{tpu_custom_call.1} parent=11 // pred_check
          %p159 = pneg %p118
        $region14: #{tpu_custom_call.1} parent=11 // pred_check_branch
          %161 = sbr.rel (%p159) target = $region16
        $region15: #{tpu_custom_call.1} parent=11 // pred_region
          %s163 = ssub.s32 512, 512
          %164 = vsyncadd [#allocation6], %s163
          %s165 = sshll.u32 [#allocation7], 4
          %s166 = int_to_ptr.vmem [resolvable:$true] %s165
          %171 = dma.hbm_to_vmem [thread:$0]  %s3, 512, %s166, [#allocation6], 128, 128, 8
        $region16: #{tpu_custom_call.1} parent=11 // pred_fallthru
          _
      $region12: #{tpu_custom_call.1} parent=5 // pred_fallthru
        _
      %p172 = scmp.lt.s32.totalorder %s19, 2
      // Predicated region
      $region17: #{tpu_custom_call.1} parent=5 // pred_check
        %p173 = pneg %p172
      $region18: #{tpu_custom_call.1} parent=5 // pred_check_branch
        %175 = sbr.rel (%p173) target = $region20
      $region19: #{tpu_custom_call.1} parent=5 // pred_region
        // Predicated region
        $region21: #{tpu_custom_call.1} parent=19 // pred_check
          %p176 = pneg %p39
        $region22: #{tpu_custom_call.1} parent=19 // pred_check_branch
          %178 = sbr.rel (%p176) target = $region24
        $region23: #{tpu_custom_call.1} parent=19 // pred_region
          %s179 = sand.u32 %s29, 1
          %s180 = scalar_lea.sflag [#allocation3], %s179
          %s181 = sand.u32 %s29, 1
          %s182 = smul.addr %s181, 80
          %s183 = scalar_lea.vmem [#allocation2], %s182
          %s185 = ssub.s32 1280, 1280
          %186 = vsyncadd %s180, %s185
          %s187 = smul.addr %s19, 20
          %s188 = smul.addr %s187, 64
          %s189 = scalar_lea.hbm %s0, %s188
          %s190 = sshll.u32 %s183, 4
          %s191 = int_to_ptr.vmem [resolvable:$true] %s190
          %196 = dma.hbm_to_vmem [thread:$0]  %s189, 1280, %s191, %s180, 64, 64, 4
        $region24: #{tpu_custom_call.1} parent=19 // pred_fallthru
          _
        // Predicated region
        $region25: #{tpu_custom_call.1} parent=19 // pred_check
          %p197 = pneg %p65
        $region26: #{tpu_custom_call.1} parent=19 // pred_check_branch
          %199 = sbr.rel (%p197) target = $region28
        $region27: #{tpu_custom_call.1} parent=19 // pred_region
          %s200 = sand.u32 %s19, 1
          %s201 = scalar_lea.sflag [#allocation6], %s200
          %s202 = sand.u32 %s55, 1
          %s203 = smul.addr %s202, 16
          %s204 = scalar_lea.vmem [#allocation5], %s203
          %s206 = ssub.s32 256, 256
          %207 = vsyncadd %s201, %s206
          %s208 = smul.addr %s19, 4
          %s209 = smul.addr %s208, 64
          %s210 = scalar_lea.hbm %s1, %s209
          %s211 = sshll.u32 %s204, 4
          %s212 = int_to_ptr.vmem [resolvable:$true] %s211
          %217 = dma.hbm_to_vmem [thread:$0]  %s210, 256, %s212, %s201, 64, 64, 4
        $region28: #{tpu_custom_call.1} parent=19 // pred_fallthru
          _
        // Predicated region
        $region29: #{tpu_custom_call.1} parent=19 // pred_check
          %p218 = pneg %p91
        $region30: #{tpu_custom_call.1} parent=19 // pred_check_branch
          %220 = sbr.rel (%p218) target = $region32
        $region31: #{tpu_custom_call.1} parent=19 // pred_region
          %p221 = scmp.lt.s32.totalorder %s19, 1
          %s222 = scalar_select %p221, %s19, 1
          %s223 = scalar_lea.vmem %s2, %s222
        $region32: #{tpu_custom_call.1} parent=19 // pred_fallthru
          _
      $region20: #{tpu_custom_call.1} parent=5 // pred_fallthru
        _
      %p224 = scmp.le.s32.totalorder 1, %s19
      %p225 = scmp.lt.s32.totalorder %s19, 3
      %p226 = pnand %p224, %p225
      %p227 = pneg %p226
      // Predicated region
      $region33: #{tpu_custom_call.1} parent=5 // pred_check
        _
      $region34: #{tpu_custom_call.1} parent=5 // pred_check_branch
        %229 = sbr.rel (%p226) target = $region36
      $region35: #{tpu_custom_call.1} parent=5 // pred_region
        %s230 = ssub.s32 %s19, 1
        %s231 = sand.u32 %s32, 1
        %s232 = scalar_lea.sflag [#allocation3], %s231
        %s233 = sand.u32 %s32, 1
        %s234 = smul.addr %s233, 80
        %s235 = scalar_lea.vmem [#allocation2], %s234
        // Predicated region
        $region37: #{tpu_custom_call.1} parent=35 // pred_check
          %p236 = pneg %p45
        $region38: #{tpu_custom_call.1} parent=35 // pred_check_branch
          %238 = sbr.rel (%p236) target = $region40
        $region39: #{tpu_custom_call.1} parent=35 // pred_region
          %239 = dma.done %s232, 1280
        $region40: #{tpu_custom_call.1} parent=35 // pred_fallthru
          _
        %s240 = sand.u32 %s24, 1
        %s241 = scalar_lea.sflag [#allocation6], %s240
        %s242 = sand.u32 %s58, 1
        %s243 = smul.addr %s242, 16
        %s244 = scalar_lea.vmem [#allocation5], %s243
        // Predicated region
        $region41: #{tpu_custom_call.1} parent=35 // pred_check
          %p245 = pneg %p71
        $region42: #{tpu_custom_call.1} parent=35 // pred_check_branch
          %247 = sbr.rel (%p245) target = $region44
        $region43: #{tpu_custom_call.1} parent=35 // pred_region
          %248 = dma.done %s241, 256
        $region44: #{tpu_custom_call.1} parent=35 // pred_fallthru
          _
        // Predicated region
        $region45: #{tpu_custom_call.1} parent=35 // pred_check
          %p249 = pneg %p118
        $region46: #{tpu_custom_call.1} parent=35 // pred_check_branch
          %251 = sbr.rel (%p249) target = $region48
        $region47: #{tpu_custom_call.1} parent=35 // pred_region
          %252 = dma.done [#allocation6], 512
        $region48: #{tpu_custom_call.1} parent=35 // pred_fallthru
          _
        %s253 = sand.u32 %s32, 1
        %s254 = scalar_lea.sflag [#allocation3], %s253
        %s255 = sand.u32 %s32, 1
        %s256 = smul.addr %s255, 80
        %s257 = scalar_lea.vmem [#allocation2], %s256
        %p258 = pneg %p45
        %p259 = pneg %p42
        %s260 = sand.u32 %s24, 1
        %s261 = scalar_lea.sflag [#allocation6], %s260
        %s262 = sand.u32 %s58, 1
        %s263 = smul.addr %s262, 16
        %s264 = scalar_lea.vmem [#allocation5], %s263
        %p265 = pneg %p71
        %p266 = pneg %p68
        %p267 = scmp.lt.s32.totalorder %s24, 1
        %s268 = scalar_select %p267, %s24, 1
        %s269 = scalar_lea.vmem %s2, %s268
        %p270 = pneg %p97
        %p271 = pneg %p94
        %p272 = pneg %p118
        %p273 = pneg %p115
        %p274 = pneg %p144
        %p275 = pneg %p141
        %s276 = sand.u32 %s131, 1
        %s277 = scalar_lea.sflag [#allocation4], %s276
        %s278 = sand.u32 %s131, 1
        %s279 = smul.addr %s278, 32
        %s280 = scalar_lea.vmem [#allocation8], %s279
        %p281 = scmp.lt.s32.totalorder %s24, 1
        %s282 = scalar_select %p281, %s24, 1
        %s283 = scalar_lea.vmem %s2, %s282
        %v285 = vld [vmem:[#allocation7] sm:$0xff]
        %v286 = vld [vmem:[#allocation7 + $0x8] sm:$0xff]
        %v287 = vld [vmem:[#allocation7 + $0x10] sm:$0xff]
        %v288 = vld [vmem:[#allocation7 + $0x18] sm:$0xff]
        %v289 = vld [vmem:[%s283] sm:$0x1]
        %v290 = vmul.f32 %v289, 2.0
        %v291 = vld [vmem:[%s235] sm:$0xf]
        %v292 = vld [vmem:[%s235 + $0x4] sm:$0xf]
        %v293 = vld [vmem:[%s235 + $0x8] sm:$0xf]
        %v294 = vld [vmem:[%s235 + $0xc] sm:$0xf]
        %v295 = vld [vmem:[%s235 + $0x10] sm:$0xf]
        %v296 = vld [vmem:[%s235 + $0x14] sm:$0xf]
        %v297 = vld [vmem:[%s235 + $0x18] sm:$0xf]
        %v298 = vld [vmem:[%s235 + $0x1c] sm:$0xf]
        %v299 = vld [vmem:[%s235 + $0x20] sm:$0xf]
        %v300 = vld [vmem:[%s235 + $0x24] sm:$0xf]
        %v301 = vld [vmem:[%s235 + $0x28] sm:$0xf]
        %v302 = vld [vmem:[%s235 + $0x2c] sm:$0xf]
        %v303 = vld [vmem:[%s235 + $0x30] sm:$0xf]
        %v304 = vld [vmem:[%s235 + $0x34] sm:$0xf]
        %v305 = vld [vmem:[%s235 + $0x38] sm:$0xf]
        %v306 = vld [vmem:[%s235 + $0x3c] sm:$0xf]
        %v307 = vld [vmem:[%s235 + $0x40] sm:$0xf]
        %v308 = vld [vmem:[%s235 + $0x44] sm:$0xf]
        %v309 = vld [vmem:[%s235 + $0x48] sm:$0xf]
        %v310 = vld [vmem:[%s235 + $0x4c] sm:$0xf]
        %v311 = vld [vmem:[%s244] sm:$0xf]
        %v312 = vld [vmem:[%s244 + $0x4] sm:$0xf]
        %v313 = vld [vmem:[%s244 + $0x8] sm:$0xf]
        %v314 = vld [vmem:[%s244 + $0xc] sm:$0xf]
        %v315 = vunpack.c.l.bf16 %v311
        %v316 = vunpack.c.l.bf16 %v312
        %v317 = vunpack.c.l.bf16 %v313
        %v318 = vunpack.c.l.bf16 %v314
        %v323 = vunpack.c.l.b16 %v285
        %v324 = vunpack.c.h.b16 %v285
        %v325 = vunpack.c.l.b16 %v286
        %v326 = vunpack.c.h.b16 %v286
        %v327 = vunpack.c.l.b16 %v287
        %v328 = vunpack.c.h.b16 %v287
        %v329 = vunpack.c.l.b16 %v288
        %v330 = vunpack.c.h.b16 %v288
        %v331 = vpack.c.b16 %v325, %v323
        %v332 = vpack.c.b16 %v326, %v324
        %v333 = vpack.c.b16 %v329, %v327
        %v334 = vpack.c.b16 %v330, %v328
        %v357 = vunpack.c.l.b16 %v291
        %v358 = vunpack.c.l.b16 %v292
        %v359 = vunpack.c.l.b16 %v293
        %v360 = vunpack.c.l.b16 %v294
        %v361 = vunpack.c.l.b16 %v295
        %v362 = vunpack.c.l.b16 %v296
        %v363 = vunpack.c.l.b16 %v297
        %v364 = vunpack.c.l.b16 %v298
        %v365 = vunpack.c.l.b16 %v299
        %v366 = vunpack.c.l.b16 %v300
        %v367 = vunpack.c.l.b16 %v301
        %v368 = vunpack.c.l.b16 %v302
        %v369 = vunpack.c.l.b16 %v303
        %v370 = vunpack.c.l.b16 %v304
        %v371 = vunpack.c.l.b16 %v305
        %v372 = vunpack.c.l.b16 %v306
        %v373 = vunpack.c.l.b16 %v307
        %v374 = vunpack.c.l.b16 %v308
        %v375 = vunpack.c.l.b16 %v309
        %v376 = vunpack.c.l.b16 %v310
        %v377 = vpack.c.b16 %v358, %v357
        %v378 = vpack.c.b16 %v360, %v359
        %v379 = vpack.c.b16 %v362, %v361
        %v380 = vpack.c.b16 %v364, %v363
        %v381 = vpack.c.b16 %v366, %v365
        %v382 = vpack.c.b16 %v368, %v367
        %v383 = vpack.c.b16 %v370, %v369
        %v384 = vpack.c.b16 %v372, %v371
        %v385 = vpack.c.b16 %v374, %v373
        %v386 = vpack.c.b16 %v376, %v375
        %vm397 = vcmask 261120
        %v399 = vsel %vm397, %v332, 0
        %v402 = vsel %vm397, %v334, 0
        %404 = vmatprep.subr.bf16.mxu0 0
        %405 = vmatpush1.bf16.msra.mxu0 %v377
        %406 = vmatprep.subr.bf16.mxu0 0
        %407 = vmatpush1.bf16.msra.mxu0 %v378
        %408 = vmatprep.subr.bf16.mxu0 0
        %409 = vmatpush1.bf16.msra.mxu0 %v379
        %410 = vmatprep.subr.bf16.mxu0 0
        %411 = vmatpush1.bf16.msra.mxu0 %v380
        %412 = vmatprep.subr.bf16.mxu0 0
        %413 = vmatpush1.bf16.msra.mxu0 %v381
        %414 = vmatprep.subr.bf16.mxu0 0
        %415 = vmatpush1.bf16.msra.mxu0 %v382
        %416 = vmatprep.subr.bf16.mxu0 0
        %417 = vmatpush1.bf16.msra.mxu0 %v383
        %418 = vmatprep.subr.bf16.mxu0 0
        %419 = vmatpush1.bf16.msra.mxu0 %v384
        %420 = vmatprep.subr.bf16.mxu0 0
        %421 = vmatpush1.bf16.msra.mxu0 %v385
        %422 = vmatprep.subr.bf16.mxu0 0
        %423 = vmatpush1.bf16.msra.mxu0 %v386
        %424 = vmatprep.subr.bf16.mxu0 0
        %425 = vmatpush1.bf16.msra.mxu0 0
        %426 = vmatprep.subr.bf16.mxu0 0
        %427 = vmatpush1.bf16.msra.mxu0 0
        %428 = vmatprep.subr.bf16.mxu0 0
        %429 = vmatpush1.bf16.msra.mxu0 0
        %430 = vmatprep.subr.bf16.mxu0 0
        %431 = vmatpush1.bf16.msra.mxu0 0
        %432 = vmatprep.subr.bf16.mxu0 0
        %433 = vmatpush1.bf16.msra.mxu0 0
        %434 = vmatprep.subr.bf16.mxu0 0
        %435 = vmatpush1.bf16.msra.mxu0 0
        %436 = vmatprep.mubr.bf16.mxu0 %v399
        %437 = vmatmul.mubr.bf16.gmra.mrb[0].mxu0 %v331
        %v438 = vpop.f32.mrb[0].mxu0
        %v439 = vadd.f32 %v315, %v438
        %v440 = vpop.f32.mrb[0].mxu0
        %v441 = vpop.f32.mrb[0].mxu0
        %v442 = vadd.f32 %v316, %v441
        %v443 = vpop.f32.mrb[0].mxu0
        %444 = vmatprep.mubr.bf16.mxu0 %v402
        %445 = vmatmul.mubr.bf16.gmra.mrb[0].mxu0 %v333
        %v446 = vpop.f32.mrb[0].mxu0
        %v447 = vadd.f32 %v317, %v446
        %v448 = vpop.f32.mrb[0].mxu0
        %v449 = vpop.f32.mrb[0].mxu0
        %v450 = vadd.f32 %v318, %v449
        %v451 = vpop.f32.mrb[0].mxu0
        %452 = vdwg.mxu0
        %v454 = vlaneseq
        %v455 = vshrl.u32 %v454, 7
        %v456 = vsub.s32 0, %v455
        %v457 = vrot.slane %v290, %v456
        %v459 = vadd.f32 %v439, %v457
        %v460 = vadd.f32 %v442, %v457
        %v461 = vadd.f32 %v447, %v457
        %v462 = vadd.f32 %v450, %v457
        %vm463 = vcmask 662528
        %464 = vst.msk [vmem:[%s280] sm:$0xff] %vm463, %v459
        %465 = vst.msk [vmem:[%s280 + $0x8] sm:$0xff] %vm463, %v460
        %466 = vst.msk [vmem:[%s280 + $0x10] sm:$0xff] %vm463, %v461
        %467 = vst.msk [vmem:[%s280 + $0x18] sm:$0xff] %vm463, %v462
        %s468 = sand.u32 %s131, 1
        %s469 = scalar_lea.sflag [#allocation4], %s468
        %s470 = sand.u32 %s131, 1
        %s471 = smul.addr %s470, 32
        %s472 = scalar_lea.vmem [#allocation8], %s471
        // Predicated region
        $region49: #{tpu_custom_call.1} parent=35 // pred_check
          %p473 = pneg %p141
        $region50: #{tpu_custom_call.1} parent=35 // pred_check_branch
          %475 = sbr.rel (%p473) target = $region52
        $region51: #{tpu_custom_call.1} parent=35 // pred_region
          %s477 = ssub.s32 512, 512
          %478 = vsyncadd %s469, %s477
          %s479 = smul.addr %s24, 4
          %s480 = smul.addr %s479, 128
          %s481 = scalar_lea.hbm %s4, %s480
          %s482 = sshll.u32 %s472, 4
          %s483 = int_to_ptr.vmem [resolvable:$true] %s482
          %488 = dma.vmem_to_hbm [thread:$0]  %s483, 512, %s481, %s469, 128, 128, 8
        $region52: #{tpu_custom_call.1} parent=35 // pred_fallthru
          _
      $region36: #{tpu_custom_call.1} parent=5 // pred_fallthru
        _
      %p489 = scmp.le.s32.totalorder 2, %s19
      // Predicated region
      $region53: #{tpu_custom_call.1} parent=5 // pred_check
        %p490 = pneg %p489
      $region54: #{tpu_custom_call.1} parent=5 // pred_check_branch
        %492 = sbr.rel (%p490) target = $region56
      $region55: #{tpu_custom_call.1} parent=5 // pred_region
        %s493 = ssub.s32 %s19, 2
        // Predicated region
        $region57: #{tpu_custom_call.1} parent=55 // pred_check
          %p494 = pneg %p147
        $region58: #{tpu_custom_call.1} parent=55 // pred_check_branch
          %496 = sbr.rel (%p494) target = $region60
        $region59: #{tpu_custom_call.1} parent=55 // pred_region
          %s497 = sand.u32 %s132, 1
          %s498 = scalar_lea.sflag [#allocation4], %s497
          %s499 = sand.u32 %s132, 1
          %s500 = smul.addr %s499, 32
          %s501 = scalar_lea.vmem [#allocation8], %s500
          %502 = dma.done %s498, 512
        $region60: #{tpu_custom_call.1} parent=55 // pred_fallthru
          _
      $region56: #{tpu_custom_call.1} parent=5 // pred_fallthru
        _
    $region6: #{tpu_custom_call.1} parent=1 // loop_footer
      %s23 = sadd.s32 1, %s19
    $region7: #{tpu_custom_call.1} parent=1 // loop_footer_branch
      %18 = sbr.rel target = $region3
    $region8: #{tpu_custom_call.1} parent=1 // loop_exit
      _
    %503 = vsyncpa [#allocation3], 1
    %s504 = scalar_lea.sflag [#allocation3], 1
    %505 = vsyncpa %s504, 1
    %506 = vsyncpa [#allocation6], 1
    %s507 = scalar_lea.sflag [#allocation6], 1
    %508 = vsyncpa %s507, 1
    %509 = vsyncpa [#allocation4], 1
    %s510 = scalar_lea.sflag [#allocation4], 1
    %511 = vsyncpa %s510, 1

</llo_original>
